<compile_context>
chip_gen: v5e
topology: v5e:2x2
jax: 0.10.0
libtpu: 0.0.40
codegen_flags: <defaults>
</compile_context>

<pallas_src>
from functools import partial

import jax
import jax.numpy as jnp
from jax.experimental import pallas as pl
from jax.experimental.pallas import tpu as pltpu


_LANES = 128
_MAX_TILE_BYTES = 4 * 1024 * 1024      # ~4 MiB per buffer per tile (dtype-aware rows)
_MIN_PALLAS_BYTES = 256 * 1024         # below this, fused XLA broadcast is faster
_VMEM_LIMIT_BYTES = 48 * 1024 * 1024   # fits v7x's 64 MiB physical VMEM with headroom


def _ceil_div(a: int, b: int) -> int:
    return -(-a // b)


def _round_up(a: int, b: int) -> int:
    return _ceil_div(a, b) * b


def _drop_path_kernel(keep_ref, x_ref, o_ref, *, inv_keep_prob: float):
    # keep_ref: (B,) int32 in SMEM (scalar prefetch).  One grid step = one
    # (sample, row-chunk) tile; the whole body is a broadcast multiply.
    b = pl.program_id(0)
    # 0.0 (dropped) or 1/keep_prob (kept); multiply in x's dtype (HBM-bound).
    scale = (keep_ref[b].astype(jnp.float32) * inv_keep_prob).astype(x_ref.dtype)
    o_ref[...] = x_ref[...] * scale


def drop_path_pallas(x, drop_prob: float = 0.0, training: bool = False,
                     *, seed: int = 0, key=None, force_pallas: bool = False,
                     max_tile_bytes: int = _MAX_TILE_BYTES):
    """Pallas implementation of drop_path(x, drop_prob, training)."""
    if drop_prob == 0.0 or not training:
        return x
    keep_prob = 1.0 - drop_prob

    B = int(x.shape[0])
    N = 1
    for d in x.shape[1:]:
        N *= int(d)

    # Per-sample keep mask (0/1), computed outside the kernel.
    # Matches torch: random_tensor = floor(keep_prob + U[0,1)).
    if key is None:
        key = jax.random.PRNGKey(seed)
    u = jax.random.uniform(key, (B,), dtype=jnp.float32)
    keep_i32 = jnp.floor(jnp.float32(keep_prob) + u).astype(jnp.int32)

    itemsize = jnp.dtype(x.dtype).itemsize
    total_bytes = B * N * itemsize
    if not force_pallas and total_bytes < _MIN_PALLAS_BYTES:
        # Small residual branches: custom-call launch + pipeline prologue would
        # dominate; a fused XLA broadcast-multiply is strictly faster here.
        bshape = (B,) + (1,) * (x.ndim - 1)
        scale = (keep_i32.astype(jnp.float32) / keep_prob).astype(x.dtype)
        return x * scale.reshape(bshape)

    # Lane-dense per-sample layout: (B, rows, 128), chunked along rows.
    rows = _ceil_div(N, _LANES)
    n_lane = rows * _LANES

    # Sublane-packing multiple: 8 rows for 32-bit, 16 for bf16, 32 for int8/fp8.
    sub = 8 * max(1, 4 // itemsize)
    cap = max(sub, (max_tile_bytes // (_LANES * itemsize)) // sub * sub)

    if rows <= cap:
        if B == 1 and rows >= 2 * sub:
            # Single-sample call: split into >=2 chunks so both v7x TensorCores
            # (and the DMA pipeline) get work.
            tile_rows = _round_up(_ceil_div(rows, 2), sub)
        else:
            tile_rows = rows   # full-extent block (legal even if rows % 8 != 0)
    else:
        tile_rows = cap
    grid_f = _ceil_div(rows, tile_rows)  # ragged last block is masked by Pallas

    x2 = x.reshape(B, N)
    if n_lane != N:
        # TODO(synk): handle the <128-element ragged tail inside the kernel
        # instead of this materializing pad + trailing slice (rare path).
        x2 = jnp.pad(x2, ((0, 0), (0, n_lane - N)))
    x3 = x2.reshape(B, rows, _LANES)

    out3 = pl.pallas_call(
        partial(_drop_path_kernel, inv_keep_prob=1.0 / keep_prob),
        out_shape=jax.ShapeDtypeStruct((B, rows, _LANES), x.dtype),
        grid_spec=pltpu.PrefetchScalarGridSpec(
            num_scalar_prefetch=1,
            grid=(B, grid_f),
            # Dropped samples (keep[b] == 0) map every chunk to block 0: with
            # the chunk axis innermost, consecutive steps hit the same block
            # index and the pipeline elides the HBM->VMEM DMA.  The kernel's
            # scale == 0 zeroes whatever stale data sits in that buffer.
            in_specs=[pl.BlockSpec((1, tile_rows, _LANES),
                                   lambda b, f, keep: (b, f * keep[b], 0))],
            out_specs=pl.BlockSpec((1, tile_rows, _LANES),
                                   lambda b, f, keep: (b, f, 0)),
        ),
        compiler_params=pltpu.CompilerParams(
            dimension_semantics=("parallel", "parallel"),
            vmem_limit_bytes=_VMEM_LIMIT_BYTES),
    )(keep_i32, x3)

    out = out3.reshape(B, n_lane)
    if n_lane != N:
        out = out[:, :N]
    return out.reshape(x.shape)


class DropPath:
    """Mirror of the PyTorch module: holds drop_prob and a training flag."""

    def __init__(self, drop_prob=None):
        self.drop_prob = 0.0 if drop_prob is None else float(drop_prob)
        self.training = True

    def __call__(self, x, seed: int = 0, key=None):
        return drop_path_pallas(x, self.drop_prob, self.training,
                                seed=seed, key=key)


def _check_per_sample(x, y, keep_prob):
    # Each sample must be either all-zero or exactly x / keep_prob.
    for b in range(x.shape[0]):
        yb = y[b]
        xb = x[b] / keep_prob
        is_zero = bool(jnp.all(yb == 0.0))
        is_scaled = bool(jnp.allclose(yb, xb, atol=1e-6, rtol=1e-6))
        assert is_zero or is_scaled, "per-sample mask semantics violated"


if __name__ == "__main__":
    keep_prob = 0.5

    # 1) Canonical small shape, forced through the Pallas kernel (N % 128 == 0,
    #    reshape-only fast path, no padding).
    x = jax.random.normal(jax.random.PRNGKey(0), (2, 4, 16, 16), dtype=jnp.float32)
    y = jax.block_until_ready(
        drop_path_pallas(x, drop_prob=0.5, training=True, seed=123,
                         force_pallas=True))
    _check_per_sample(x, y, keep_prob)

    # 2) Ragged tail (N % 128 != 0) -> pad fallback path.
    x_r = jax.random.normal(jax.random.PRNGKey(1), (2, 3, 7, 11), dtype=jnp.float32)
    y_r = jax.block_until_ready(
        drop_path_pallas(x_r, drop_prob=0.5, training=True, seed=7,
                         force_pallas=True))
    _check_per_sample(x_r, y_r, keep_prob)

    # 3) Multi-chunk grid + dropped-sample DMA-elision index_map (tiny tile cap
    #    so chunking happens even at small demo shapes).
    x_m = jax.random.normal(jax.random.PRNGKey(2), (2, 4, 32, 32), dtype=jnp.float32)
    y_m = jax.block_until_ready(
        drop_path_pallas(x_m, drop_prob=0.5, training=True, seed=11,
                         force_pallas=True, max_tile_bytes=8 * _LANES * 4))
    _check_per_sample(x_m, y_m, keep_prob)

    # 4) Module auto path (small input -> fused XLA) must match the kernel, and
    #    the eval path must be identity.
    mod = DropPath(drop_prob=0.5)
    mod.training = True
    y_auto = jax.block_until_ready(mod(x, seed=123))
    _check_per_sample(x, y_auto, keep_prob)
    assert bool(jnp.allclose(y, y_auto, atol=1e-6)), "pallas vs XLA path mismatch"

    mod.training = False
    y_eval = jax.block_until_ready(mod(x))
    assert bool(jnp.array_equal(y_eval, x)), "eval path must be identity"

    print("KERNEL_OK")
</pallas_src>

<mosaic_0001>
module attributes {stable_mosaic.version = 11 : i64} {
  func.func @_drop_path_kernel(%arg0: i32, %arg1: i32, %arg2: memref<2xi32, #tpu.memory_space<smem>>, %arg3: memref<1x8x128xf32, #tpu.memory_space<vmem>>, %arg4: memref<1x8x128xf32, #tpu.memory_space<vmem>>) attributes {dimension_semantics = [#tpu.dimension_semantics<parallel>, #tpu.dimension_semantics<parallel>], iteration_bounds = array<i64: 2, 1>, scalar_prefetch = 1 : i64, scratch_operands = 0 : i64, tpu.core_type = #tpu.core_type<tc>, window_params = [{transform_indices = @transform_0, window_bounds = array<i64: 1, 8, 128>}, {transform_indices = @transform_1, window_bounds = array<i64: 1, 8, 128>}]} {
    %0 = arith.index_cast %arg0 : i32 to index
    %1 = memref.load %arg2[%0] : memref<2xi32, #tpu.memory_space<smem>>
    %2 = arith.sitofp %1 : i32 to f32
    %cst = arith.constant 2.000000e+00 : f32
    %3 = arith.mulf %2, %cst : f32
    %c0 = arith.constant 0 : index
    %c0_0 = arith.constant 0 : index
    %c0_1 = arith.constant 0 : index
    %4 = vector.load %arg3[%c0, %c0_0, %c0_1] : memref<1x8x128xf32, #tpu.memory_space<vmem>>, vector<1x8x128xf32>
    %5 = vector.broadcast %3 : f32 to vector<1x8x128xf32>
    %6 = arith.mulf %4, %5 : vector<1x8x128xf32>
    %c0_2 = arith.constant 0 : index
    %c0_3 = arith.constant 0 : index
    %c0_4 = arith.constant 0 : index
    %7 = vector.load %arg4[%c0_2, %c0_3, %c0_4] : memref<1x8x128xf32, #tpu.memory_space<vmem>>, vector<1x8x128xf32>
    tpu.vector_store %arg4[%c0_2, %c0_3, %c0_4], %6 {strides = array<i32>} : memref<1x8x128xf32, #tpu.memory_space<vmem>>, vector<1x8x128xf32>,
    return
  }
  func.func @transform_0(%arg0: i32, %arg1: i32, %arg2: memref<2xi32, #tpu.memory_space<smem>>) -> (i32, i32, i32) {
    %0 = arith.index_cast %arg0 : i32 to index
    %1 = memref.load %arg2[%0] : memref<2xi32, #tpu.memory_space<smem>>
    %2 = arith.muli %arg1, %1 : i32
    %c0_i32 = arith.constant 0 : i32
    %c0_i32_0 = arith.constant 0 : i32
    return %arg0, %2, %c0_i32 : i32, i32, i32
  }
  func.func @transform_1(%arg0: i32, %arg1: i32, %arg2: memref<2xi32, #tpu.memory_space<smem>>) -> (i32, i32, i32) {
    %c0_i32 = arith.constant 0 : i32
    %c0_i32_0 = arith.constant 0 : i32
    return %arg0, %arg1, %c0_i32 : i32, i32, i32
  }
}

</mosaic_0001>

<llo_original>
// kernel: tpu_custom_call.1
$region0: #{tpu_custom_call.1}
  #allocation0 [shape = 'u32[]', space=smem, size = 0x4, offset = 0x4, fixed_abs, tag = 'smem constant byte address 0x4 - core index']
  #allocation1 [shape = 'u32[72,128]{1,0:T(1,128)}', space=vmem, size = 0x9000, scoped, tag = 'internal scratch']
  #allocation2 [shape = 's32[1]{0}', space=sflag, size = 0x4, scoped, tag = 'scoped memory for tpu_custom_call.1']
  #allocation3 [shape = 'u8[512]{0}', space=smem, size = 0x200, scoped, tag = 'prefetched SMEM operand 0']
  %s0 = inlined_call_operand.hbm [shape: s32[2], index: 0, kind: input, shape index: {}]
  %s1 = inlined_call_operand.hbm [shape: f32[2,8,128], index: 1, kind: input, shape index: {}]
  %s2 = inlined_call_operand.hbm [shape: f32[2,8,128], index: 2, kind: output, shape index: {}]
  %s3 = sld [smem:[#allocation0]]
  $region41: #{tpu_custom_call.1} parent=0
    _
  %s5 = ssub.s32 1, %s3
  %s6 = scalar_select 0, %s5, %s3
  %s8 = sshll.u32 %s0, 4
  %s9 = int_to_ptr.hbm [resolvable:$true] %s8
  %11 = dma.hbm_to_smem %s9, 16, [#allocation3], [#allocation2]
  %13 = dma.done [#allocation2], 16
  %14 = sfence
  $region1: #{tpu_custom_call.1} parent=0
    #allocation4 [shape = 'u8[8192]{0}', space=vmem, size = 0x2000, scoped, tag = 'input window, operand 1']
    #allocation5 [shape = 's32[2]{0}', space=sflag, size = 0x8, scoped, tag = 'scoped memory for tpu_custom_call.1']
    #allocation6 [shape = 's32[2]{0}', space=sflag, size = 0x8, scoped, tag = 'scoped memory for tpu_custom_call.1']
    #allocation7 [shape = 'u8[8192]{0}', space=vmem, size = 0x2000, scoped, tag = 'output window, operand 0']
    %15 = vsyncpa [#allocation5], 0
    %s16 = scalar_lea.sflag [#allocation5], 1
    %17 = vsyncpa %s16, 0
    %18 = vsyncpa [#allocation6], 0
    %s19 = scalar_lea.sflag [#allocation6], 1
    %20 = vsyncpa %s19, 0
    loop: start=0, step=1, limit=4
    $region2: #{tpu_custom_call.1} parent=1 // loop_pre_header
      _
    $region3: #{tpu_custom_call.1} parent=1 // loop_header
      %s22 = sphi 0, %s26
      %p23 = scmp.ge.s32.totalorder %s22, 4
      %s29 = sphi 0, %s41
      %s30 = sphi 0, %s37
      %s31 = sphi 0, %s29
      %s32 = sphi 0, %s30
      %s33 = sphi 0, %s31
      %s34 = sphi 0, %s32
      %s50 = sphi 0, %s52
      %s53 = sphi 0, %s50
      %s54 = sphi 0, %s53
      %s70 = sphi 0, %s54
      %s78 = sphi 0, %s80
      %s81 = sphi 0, %s78
      %s82 = sphi 0, %s81
      %s98 = sphi 0, %s82
    $region4: #{tpu_custom_call.1} parent=1 // loop_header_branch
      %25 = sbr.rel (%p23) target = $region8
    $region5: #{tpu_custom_call.1} parent=1 // loop_body
      %s27 = ssub.s32 %s22, 1
      %s28 = ssub.s32 %s22, 2
      %s35 = sadd.s32 1, %s30
      %p36 = scmp.ge.s32.totalorder %s35, 1
      %s37 = scalar_select %p36, 0, %s35
      %s38 = sadd.s32 1, %s29
      %s39 = scalar_select %p36, %s38, %s29
      %p40 = scmp.ge.s32.totalorder %s39, 2
      %s41 = scalar_select %p40, 0, %s39
      %s42 = sld [smem:[#allocation3 + %s29]]
      %s43 = smul.u32 %s30, %s42
      %s44 = sld [smem:[#allocation3 + %s41]]
      %s45 = smul.u32 %s37, %s44
      %s46 = ssub.s32 %s29, %s41
      %s47 = ssub.s32 %s43, %s45
      %s48 = sor.u32 %s46, %s47
      %p49 = scmp.eq.s32.totalorder %s48, 0
      %s51 = sadd.s32 %s50, 1
      %s52 = scalar_select %p49, %s50, %s51
      %p55 = pneg %p49
      %p56 = scmp.eq.s32.totalorder %s22, 1
      %p57 = por %p55, %p56
      %p58 = scmp.ne.s32.totalorder %s50, %s53
      %p59 = scmp.eq.s32.totalorder %s22, 0
      %p60 = por %p58, %p59
      %p61 = scmp.ne.s32.totalorder %s50, %s53
      %p62 = scmp.eq.s32.totalorder %s27, 1
      %p63 = por %p61, %p62
      %p64 = scmp.ne.s32.totalorder %s53, %s54
      %p65 = scmp.eq.s32.totalorder %s27, 0
      %p66 = por %p64, %p65
      %p67 = scmp.ne.s32.totalorder %s53, %s54
      %p68 = scmp.eq.s32.totalorder %s28, 1
      %p69 = por %p67, %p68
      %p71 = scmp.ne.s32.totalorder %s54, %s70
      %p72 = scmp.eq.s32.totalorder %s28, 0
      %p73 = por %p71, %p72
      %s74 = ssub.s32 %s29, %s41
      %s75 = ssub.s32 %s30, %s37
      %s76 = sor.u32 %s74, %s75
      %p77 = scmp.eq.s32.totalorder %s76, 0
      %s79 = sadd.s32 %s78, 1
      %s80 = scalar_select %p77, %s78, %s79
      %p83 = pneg %p77
      %p84 = scmp.eq.s32.totalorder %s22, 1
      %p85 = por %p83, %p84
      %p86 = scmp.ne.s32.totalorder %s78, %s81
      %p87 = scmp.eq.s32.totalorder %s22, 0
      %p88 = por %p86, %p87
      %p89 = scmp.ne.s32.totalorder %s78, %s81
      %p90 = scmp.eq.s32.totalorder %s27, 1
      %p91 = por %p89, %p90
      %p92 = scmp.ne.s32.totalorder %s81, %s82
      %p93 = scmp.eq.s32.totalorder %s27, 0
      %p94 = por %p92, %p93
      %p95 = scmp.ne.s32.totalorder %s81, %s82
      %p96 = scmp.eq.s32.totalorder %s28, 1
      %p97 = por %p95, %p96
      %p99 = scmp.ne.s32.totalorder %s82, %s98
      %p100 = scmp.eq.s32.totalorder %s28, 0
      %p101 = por %p99, %p100
      %p102 = scmp.le.s32.totalorder 1, %s22
      %p103 = scmp.lt.s32.totalorder %s22, 3
      %p104 = pnand %p102, %p103
      %p105 = pneg %p104
      // Predicated region
      $region9: #{tpu_custom_call.1} parent=5 // pred_check
        _
      $region10: #{tpu_custom_call.1} parent=5 // pred_check_branch
        %107 = sbr.rel (%p104) target = $region12
      $region11: #{tpu_custom_call.1} parent=5 // pred_region
        %s108 = ssub.s32 %s22, 1
      $region12: #{tpu_custom_call.1} parent=5 // pred_fallthru
        _
      %p109 = scmp.lt.s32.totalorder %s22, 2
      // Predicated region
      $region13: #{tpu_custom_call.1} parent=5 // pred_check
        %p110 = pneg %p109
      $region14: #{tpu_custom_call.1} parent=5 // pred_check_branch
        %112 = sbr.rel (%p110) target = $region16
      $region15: #{tpu_custom_call.1} parent=5 // pred_region
        // Predicated region
        $region17: #{tpu_custom_call.1} parent=15 // pred_check
          %p113 = pneg %p60
        $region18: #{tpu_custom_call.1} parent=15 // pred_check_branch
          %115 = sbr.rel (%p113) target = $region20
        $region19: #{tpu_custom_call.1} parent=15 // pred_region
          %s116 = sand.u32 %s50, 1
          %s117 = scalar_lea.sflag [#allocation5], %s116
          %s118 = sand.u32 %s50, 1
          %s119 = smul.addr %s118, 8
          %s120 = scalar_lea.vmem [#allocation4], %s119
          %s121 = sld [smem:[#allocation3 + %s29]]
          %s122 = smul.u32 %s30, %s121
          %124 = vsyncadd %s117, 0
          %s125 = sadd.s32 %s122, %s29
          %s126 = smul.addr %s125, 8
          %s127 = scalar_lea.hbm %s1, %s126
          %s129 = sshll.u32 %s127, 4
          %s130 = int_to_ptr.hbm [resolvable:$true] %s129
          %s131 = sshll.u32 %s120, 4
          %s132 = int_to_ptr.vmem [resolvable:$true] %s131
          %134 = dma.hbm_to_vmem [thread:$0]  %s130, 128, %s132, %s117
        $region20: #{tpu_custom_call.1} parent=15 // pred_fallthru
          _
      $region16: #{tpu_custom_call.1} parent=5 // pred_fallthru
        _
      %p135 = scmp.le.s32.totalorder 1, %s22
      %p136 = scmp.lt.s32.totalorder %s22, 3
      %p137 = pnand %p135, %p136
      %p138 = pneg %p137
      // Predicated region
      $region21: #{tpu_custom_call.1} parent=5 // pred_check
        _
      $region22: #{tpu_custom_call.1} parent=5 // pred_check_branch
        %140 = sbr.rel (%p137) target = $region24
      $region23: #{tpu_custom_call.1} parent=5 // pred_region
        %s141 = ssub.s32 %s22, 1
        %s142 = sand.u32 %s53, 1
        %s143 = scalar_lea.sflag [#allocation5], %s142
        %s144 = sand.u32 %s53, 1
        %s145 = smul.addr %s144, 8
        %s146 = scalar_lea.vmem [#allocation4], %s145
        // Predicated region
        $region25: #{tpu_custom_call.1} parent=23 // pred_check
          %p147 = pneg %p66
        $region26: #{tpu_custom_call.1} parent=23 // pred_check_branch
          %149 = sbr.rel (%p147) target = $region28
        $region27: #{tpu_custom_call.1} parent=23 // pred_region
          %151 = dma.done %s143, 128
        $region28: #{tpu_custom_call.1} parent=23 // pred_fallthru
          _
        %s152 = sand.u32 %s53, 1
        %s153 = scalar_lea.sflag [#allocation5], %s152
        %s154 = sand.u32 %s53, 1
        %s155 = smul.addr %s154, 8
        %s156 = scalar_lea.vmem [#allocation4], %s155
        %p157 = pneg %p66
        %p158 = pneg %p63
        %p159 = pneg %p94
        %p160 = pneg %p91
        %s161 = sand.u32 %s81, 1
        %s162 = scalar_lea.sflag [#allocation6], %s161
        %s163 = sand.u32 %s81, 1
        %s164 = smul.addr %s163, 8
        %s165 = scalar_lea.vmem [#allocation7], %s164
        %s166 = sld [smem:[#allocation3 + %s31]]
        %s167 = smul.u32 %s32, %s166
        %s168 = sld [smem:[#allocation3 + %s31]]
        %s169 = scvt.s32.f32 %s168
        %s170 = smul.f32 %s169, 2.0
        %v171 = vld [vmem:[%s146] sm:$0xff]
        %v172 = vstv %s170
        %v173 = vmul.f32 %v171, %v172
        %174 = vst [vmem:[%s165] sm:$0xff] %v173
        %s175 = sand.u32 %s81, 1
        %s176 = scalar_lea.sflag [#allocation6], %s175
        %s177 = sand.u32 %s81, 1
        %s178 = smul.addr %s177, 8
        %s179 = scalar_lea.vmem [#allocation7], %s178
        // Predicated region
        $region29: #{tpu_custom_call.1} parent=23 // pred_check
          %p180 = pneg %p91
        $region30: #{tpu_custom_call.1} parent=23 // pred_check_branch
          %182 = sbr.rel (%p180) target = $region32
        $region31: #{tpu_custom_call.1} parent=23 // pred_region
          %184 = vsyncadd %s176, 0
          %s185 = sadd.s32 %s32, %s31
          %s186 = smul.addr %s185, 8
          %s187 = scalar_lea.hbm %s2, %s186
          %s189 = sshll.u32 %s179, 4
          %s190 = int_to_ptr.vmem [resolvable:$true] %s189
          %s191 = sshll.u32 %s187, 4
          %s192 = int_to_ptr.hbm [resolvable:$true] %s191
          %194 = dma.vmem_to_hbm [thread:$0]  %s190, 128, %s192, %s176
        $region32: #{tpu_custom_call.1} parent=23 // pred_fallthru
          _
      $region24: #{tpu_custom_call.1} parent=5 // pred_fallthru
        _
      %p195 = scmp.le.s32.totalorder 2, %s22
      // Predicated region
      $region33: #{tpu_custom_call.1} parent=5 // pred_check
        %p196 = pneg %p195
      $region34: #{tpu_custom_call.1} parent=5 // pred_check_branch
        %198 = sbr.rel (%p196) target = $region36
      $region35: #{tpu_custom_call.1} parent=5 // pred_region
        %s199 = ssub.s32 %s22, 2
        // Predicated region
        $region37: #{tpu_custom_call.1} parent=35 // pred_check
          %p200 = pneg %p97
        $region38: #{tpu_custom_call.1} parent=35 // pred_check_branch
          %202 = sbr.rel (%p200) target = $region40
        $region39: #{tpu_custom_call.1} parent=35 // pred_region
          %s203 = sand.u32 %s82, 1
          %s204 = scalar_lea.sflag [#allocation6], %s203
          %s205 = sand.u32 %s82, 1
          %s206 = smul.addr %s205, 8
          %s207 = scalar_lea.vmem [#allocation7], %s206
          %209 = dma.done %s204, 128
        $region40: #{tpu_custom_call.1} parent=35 // pred_fallthru
          _
      $region36: #{tpu_custom_call.1} parent=5 // pred_fallthru
        _
    $region6: #{tpu_custom_call.1} parent=1 // loop_footer
      %s26 = sadd.s32 1, %s22
    $region7: #{tpu_custom_call.1} parent=1 // loop_footer_branch
      %21 = sbr.rel target = $region3
    $region8: #{tpu_custom_call.1} parent=1 // loop_exit
      _
    %210 = vsyncpa [#allocation5], 1
    %s211 = scalar_lea.sflag [#allocation5], 1
    %212 = vsyncpa %s211, 1
    %213 = vsyncpa [#allocation6], 1
    %s214 = scalar_lea.sflag [#allocation6], 1
    %215 = vsyncpa %s214, 1

</llo_original>
